<compile_context>
chip_gen: v7x
topology: tpu7x:2x2x1
jax: 0.10.0
libtpu: 0.0.40
codegen_flags: <defaults>
</compile_context>

<pallas_src>
import jax
import jax.numpy as jnp
from jax.experimental import pallas as pl
from jax.experimental.pallas import tpu as pltpu

EPS = 1e-5


def _round_up(v, m):
    return (v + m - 1) // m * m


def make_convblock_kernel(total_elems, tm, k_dim):
    """total_elems = N*H*W (BatchNorm sample count per channel); tm = pooled rows/tile."""

    def kernel(p_ref, w_ref, g_ref, beta_ref, o_ref, ssum_ref, ssq_ref):
        ph = pl.program_id(0)   # 0: stats pass, 1: apply pass
        t = pl.program_id(1)    # row-tile index

        # Fused conv matmul: all 4 pool positions of this row tile as one tall matmul.
        # p_ref block is (4, tm, K); merging the leading dims is layout-trivial.
        p = p_ref[...].reshape(4 * tm, k_dim)
        y = jnp.dot(p, w_ref[...], preferred_element_type=jnp.float32)   # (4*tm, Cp) f32

        @pl.when(jnp.logical_and(ph == 0, t == 0))
        def _init_stats():
            ssum_ref[...] = jnp.zeros_like(ssum_ref)
            ssq_ref[...] = jnp.zeros_like(ssq_ref)

        @pl.when(ph == 0)
        def _accumulate_stats():
            # Zero-padded rows (Mp padding) contribute 0 to both sums -> stats stay exact.
            ssum_ref[...] += jnp.sum(y, axis=0, keepdims=True)
            ssq_ref[...] += jnp.sum(y * y, axis=0, keepdims=True)

        @pl.when(jnp.logical_and(ph == 1, t == 0))
        def _finalize_stats():
            # NOTE: one-pass variance (E[y^2] - E[y]^2) can lose precision when |mean| is
            # large vs. std; acceptable in f32 at these magnitudes.
            mean = ssum_ref[...] / total_elems
            var = jnp.maximum(ssq_ref[...] / total_elems - mean * mean, 0.0)
            inv = jax.lax.rsqrt(var + EPS)
            scale = g_ref[...] * inv
            shift = beta_ref[...] - mean * scale
            ssum_ref[...] = scale    # scratch now holds per-channel scale
            ssq_ref[...] = shift     # scratch now holds per-channel shift

        @pl.when(ph == 1)
        def _apply():
            yn = y * ssum_ref[...] + ssq_ref[...]                 # BN affine
            pooled = jnp.maximum(
                jnp.maximum(yn[0 * tm:1 * tm], yn[1 * tm:2 * tm]),
                jnp.maximum(yn[2 * tm:3 * tm], yn[3 * tm:4 * tm]))  # 2x2 max-pool
            o_ref[...] = jnp.maximum(pooled, 0.0).astype(o_ref.dtype)

    return kernel


def convblock_forward(x, w, b, gamma, beta, *, block_m=512):
    """x: (N, Cin, H, W) NCHW.  w: (Cout, Cin, 3, 3).  Returns (N, Cout, H//2, W//2).

    `b` (the conv bias) is accepted for interface parity but unused: training-mode
    BatchNorm subtracts the batch mean, which cancels a per-channel bias exactly.
    For very large channel counts reduce `block_m` (VMEM footprint ~ 8*block_m*K bytes).
    """
    del b
    N, Cin, H, W = x.shape
    Cout = w.shape[0]
    assert H % 2 == 0 and W % 2 == 0

    K = 9 * Cin
    Cp = _round_up(Cout, 128)                 # lane-dense output / full MXU width
    Ho, Wo = H // 2, W // 2
    Mp = N * Ho * Wo                          # pooled output rows

    tm = _round_up(min(block_m, _round_up(Mp, 16)), 16)   # 16-aligned (bf16 sublane pack)
    Mp_pad = _round_up(Mp, tm)
    n_tiles = Mp_pad // tm

    # ---- wrapper-side im2col grouped by 2x2 pool position (plain XLA ops, bf16) ----
    x_nhwc = jnp.transpose(x, (0, 2, 3, 1)).astype(jnp.bfloat16)
    x_pad = jnp.pad(x_nhwc, ((0, 0), (1, 1), (1, 1), (0, 0)))
    cols = [x_pad[:, ky:ky + H, kx:kx + W, :] for ky in range(3) for kx in range(3)]
    patches = jnp.stack(cols, axis=3).reshape(N, H, W, K)
    patches = patches.reshape(N, Ho, 2, Wo, 2, K)
    patches = jnp.transpose(patches, (2, 4, 0, 1, 3, 5)).reshape(4, Mp, K)
    if Mp_pad != Mp:
        patches = jnp.pad(patches, ((0, 0), (0, Mp_pad - Mp), (0, 0)))

    # Weight as (K, Cp), rows ordered (ky, kx, cin); channels zero-padded to Cp lanes.
    wmat = jnp.transpose(w, (2, 3, 1, 0)).reshape(K, Cout)
    wmat = jnp.pad(wmat, ((0, 0), (0, Cp - Cout))).astype(jnp.bfloat16)
    g2 = jnp.pad(gamma.astype(jnp.float32).reshape(1, Cout), ((0, 0), (0, Cp - Cout)))
    bt2 = jnp.pad(beta.astype(jnp.float32).reshape(1, Cout), ((0, 0), (0, Cp - Cout)))

    total = float(N * H * W)                  # BN sample count per channel

    flops = 2 * 2 * (4 * Mp_pad) * K * Cp     # conv matmul runs in both phases
    bytes_accessed = (2 * (4 * Mp_pad * K) * 2      # bf16 patches, read in both phases
                      + 2 * (K * Cp) * 2            # bf16 weights
                      + 2 * (2 * Cp) * 4            # gamma / beta
                      + Mp_pad * Cp * 4)            # f32 output
    cost = pl.CostEstimate(flops=flops, transcendentals=Cp,
                           bytes_accessed=bytes_accessed)

    out2d = pl.pallas_call(
        make_convblock_kernel(total, tm, K),
        out_shape=jax.ShapeDtypeStruct((Mp_pad, Cp), jnp.float32),
        grid_spec=pltpu.PrefetchScalarGridSpec(
            num_scalar_prefetch=0,
            grid=(2, n_tiles),                        # (phase, row tile)
            in_specs=[
                pl.BlockSpec((4, tm, K), lambda ph, t: (0, t, 0)),   # patches tile
                pl.BlockSpec((K, Cp), lambda ph, t: (0, 0)),         # weights (resident)
                pl.BlockSpec((1, Cp), lambda ph, t: (0, 0)),         # gamma
                pl.BlockSpec((1, Cp), lambda ph, t: (0, 0)),         # beta
            ],
            # Phase 0 keeps the (unwritten) output parked on block 0 -> no per-step
            # writeback; phase 1 writes every block once, lane-dense (Cp % 128 == 0).
            out_specs=pl.BlockSpec((tm, Cp), lambda ph, t: (ph * t, 0)),
            scratch_shapes=[pltpu.VMEM((1, Cp), jnp.float32),   # ssum  -> later: scale
                            pltpu.VMEM((1, Cp), jnp.float32)],  # ssq   -> later: shift
        ),
        compiler_params=pltpu.CompilerParams(
            dimension_semantics=("arbitrary", "arbitrary"),
            vmem_limit_bytes=48 * 1024 * 1024,
        ),
        cost_estimate=cost,
    )(patches, wmat, g2, bt2)

    out = out2d[:Mp, :Cout].reshape(N, Ho, Wo, Cout)
    return jnp.transpose(out, (0, 3, 1, 2))            # back to NCHW


def reference(x, w, b, gamma, beta):
    """Pure-JAX f32 reference reproducing the PyTorch forward (training-mode BN)."""
    y = jax.lax.conv_general_dilated(
        x, w, window_strides=(1, 1), padding=((1, 1), (1, 1)),
        dimension_numbers=("NCHW", "OIHW", "NCHW"))
    y = y + b.reshape(1, -1, 1, 1)
    mean = jnp.mean(y, axis=(0, 2, 3), keepdims=True)
    var = jnp.mean((y - mean) ** 2, axis=(0, 2, 3), keepdims=True)
    y = (y - mean) * jax.lax.rsqrt(var + EPS)
    y = y * gamma.reshape(1, -1, 1, 1) + beta.reshape(1, -1, 1, 1)
    N, C, H, W = y.shape
    y = y.reshape(N, C, H // 2, 2, W // 2, 2).max(axis=(3, 5))
    return jnp.maximum(y, 0.0)


if __name__ == "__main__":
    N, Cin, Cout, H, W = 2, 4, 8, 16, 16

    key = jax.random.PRNGKey(0)
    kx, kw, kb, kg, kbeta = jax.random.split(key, 5)
    x = jax.random.normal(kx, (N, Cin, H, W), dtype=jnp.float32)
    w = jax.random.normal(kw, (Cout, Cin, 3, 3), dtype=jnp.float32) * 0.1
    b = jax.random.normal(kb, (Cout,), dtype=jnp.float32) * 0.1
    gamma = 1.0 + 0.1 * jax.random.normal(kg, (Cout,), dtype=jnp.float32)
    beta = 0.1 * jax.random.normal(kbeta, (Cout,), dtype=jnp.float32)

    # block_m=64 -> 2 row tiles at this toy size, exercising the multi-tile two-phase path.
    out = jax.block_until_ready(convblock_forward(x, w, b, gamma, beta, block_m=64))
    ref = jax.block_until_ready(reference(x, w, b, gamma, beta))

    assert out.shape == (N, Cout, H // 2, W // 2)
    err = float(jnp.max(jnp.abs(out - ref)))
    # bf16 matmul inputs (intentional, per perf review) => looser tolerance than pure f32.
    assert err < 2e-2, f"max abs err = {err}"
    print("KERNEL_OK")
</pallas_src>

<mosaic_0001>
module attributes {stable_mosaic.version = 11 : i64} {
  func.func @kernel(%arg0: i32, %arg1: i32, %arg2: memref<4x64x36xbf16, #tpu.memory_space<vmem>>, %arg3: memref<36x128xbf16, #tpu.memory_space<vmem>>, %arg4: memref<1x128xf32, #tpu.memory_space<vmem>>, %arg5: memref<1x128xf32, #tpu.memory_space<vmem>>, %arg6: memref<64x128xf32, #tpu.memory_space<vmem>>, %arg7: memref<1x128xf32, #tpu.memory_space<vmem>>, %arg8: memref<1x128xf32, #tpu.memory_space<vmem>>) attributes {dimension_semantics = [#tpu.dimension_semantics<arbitrary>, #tpu.dimension_semantics<arbitrary>], iteration_bounds = array<i64: 2, 2>, scalar_prefetch = 0 : i64, scratch_operands = 2 : i64, tpu.core_type = #tpu.core_type<tc>, window_params = [{transform_indices = @transform_0, window_bounds = array<i64: 4, 64, 36>}, {pipeline_mode = #tpu.pipeline_mode<synchronous>, transform_indices = @transform_1, window_bounds = array<i64: 36, 128>}, {pipeline_mode = #tpu.pipeline_mode<synchronous>, transform_indices = @transform_2, window_bounds = array<i64: 1, 128>}, {pipeline_mode = #tpu.pipeline_mode<synchronous>, transform_indices = @transform_3, window_bounds = array<i64: 1, 128>}, {transform_indices = @transform_4, window_bounds = array<i64: 64, 128>}]} {
    %c0 = arith.constant 0 : index
    %c0_0 = arith.constant 0 : index
    %c0_1 = arith.constant 0 : index
    %0 = vector.load %arg2[%c0, %c0_0, %c0_1] : memref<4x64x36xbf16, #tpu.memory_space<vmem>>, vector<4x64x36xbf16>
    %1 = vector.shape_cast %0 : vector<4x64x36xbf16> to vector<256x36xbf16>
    %c0_2 = arith.constant 0 : index
    %c0_3 = arith.constant 0 : index
    %2 = vector.load %arg3[%c0_2, %c0_3] : memref<36x128xbf16, #tpu.memory_space<vmem>>, vector<36x128xbf16>
    %cst = arith.constant dense<0.000000e+00> : vector<256x128xf32>
    %3 = tpu.matmul %1, %2, %cst {dimension_numbers = #tpu.dot_dimension_numbers<[1], [0], [0], [1], [0, 0, 1, 1], [], []>} : vector<256x36xbf16>, vector<36x128xbf16>, vector<256x128xf32> -> vector<256x128xf32>
    %c0_i32 = arith.constant 0 : i32
    %4 = arith.cmpi eq, %arg0, %c0_i32 : i32
    %c0_i32_4 = arith.constant 0 : i32
    %5 = arith.cmpi eq, %arg1, %c0_i32_4 : i32
    %6 = arith.andi %4, %5 : i1
    %7 = arith.extui %6 : i1 to i32
    %c0_i32_5 = arith.constant 0 : i32
    %8 = arith.cmpi ne, %7, %c0_i32_5 : i32
    scf.if %8 {
      %cst_12 = arith.constant 0.000000e+00 : f32
      %20 = vector.broadcast %cst_12 : f32 to vector<1x128xf32>
      %c0_13 = arith.constant 0 : index
      %c0_14 = arith.constant 0 : index
      %21 = vector.load %arg7[%c0_13, %c0_14] : memref<1x128xf32, #tpu.memory_space<vmem>>, vector<1x128xf32>
      tpu.vector_store %arg7[%c0_13, %c0_14], %20 {strides = array<i32>} : memref<1x128xf32, #tpu.memory_space<vmem>>, vector<1x128xf32>,
      %cst_15 = arith.constant 0.000000e+00 : f32
      %22 = vector.broadcast %cst_15 : f32 to vector<1x128xf32>
      %c0_16 = arith.constant 0 : index
      %c0_17 = arith.constant 0 : index
      %23 = vector.load %arg8[%c0_16, %c0_17] : memref<1x128xf32, #tpu.memory_space<vmem>>, vector<1x128xf32>
      tpu.vector_store %arg8[%c0_16, %c0_17], %22 {strides = array<i32>} : memref<1x128xf32, #tpu.memory_space<vmem>>, vector<1x128xf32>,
    } else {
    }
    %c0_i32_6 = arith.constant 0 : i32
    %9 = arith.cmpi eq, %arg0, %c0_i32_6 : i32
    %10 = arith.extui %9 : i1 to i32
    %c0_i32_7 = arith.constant 0 : i32
    %11 = arith.cmpi ne, %10, %c0_i32_7 : i32
    scf.if %11 {
      %c0_12 = arith.constant 0 : index
      %c0_13 = arith.constant 0 : index
      %20 = vector.load %arg7[%c0_12, %c0_13] : memref<1x128xf32, #tpu.memory_space<vmem>>, vector<1x128xf32>
      %cst_14 = arith.constant dense<0.000000e+00> : vector<128xf32>
      %21 = vector.multi_reduction <add>, %3, %cst_14 [0] : vector<256x128xf32> to vector<128xf32>
      %22 = vector.shape_cast %21 : vector<128xf32> to vector<1x128xf32>
      %23 = arith.addf %20, %22 : vector<1x128xf32>
      %c0_15 = arith.constant 0 : index
      %c0_16 = arith.constant 0 : index
      %24 = vector.load %arg7[%c0_15, %c0_16] : memref<1x128xf32, #tpu.memory_space<vmem>>, vector<1x128xf32>
      tpu.vector_store %arg7[%c0_15, %c0_16], %23 {strides = array<i32>} : memref<1x128xf32, #tpu.memory_space<vmem>>, vector<1x128xf32>,
      %c0_17 = arith.constant 0 : index
      %c0_18 = arith.constant 0 : index
      %25 = vector.load %arg8[%c0_17, %c0_18] : memref<1x128xf32, #tpu.memory_space<vmem>>, vector<1x128xf32>
      %26 = arith.mulf %3, %3 : vector<256x128xf32>
      %cst_19 = arith.constant dense<0.000000e+00> : vector<128xf32>
      %27 = vector.multi_reduction <add>, %26, %cst_19 [0] : vector<256x128xf32> to vector<128xf32>
      %28 = vector.shape_cast %27 : vector<128xf32> to vector<1x128xf32>
      %29 = arith.addf %25, %28 : vector<1x128xf32>
      %c0_20 = arith.constant 0 : index
      %c0_21 = arith.constant 0 : index
      %30 = vector.load %arg8[%c0_20, %c0_21] : memref<1x128xf32, #tpu.memory_space<vmem>>, vector<1x128xf32>
      tpu.vector_store %arg8[%c0_20, %c0_21], %29 {strides = array<i32>} : memref<1x128xf32, #tpu.memory_space<vmem>>, vector<1x128xf32>,
    } else {
    }
    %c1_i32 = arith.constant 1 : i32
    %12 = arith.cmpi eq, %arg0, %c1_i32 : i32
    %c0_i32_8 = arith.constant 0 : i32
    %13 = arith.cmpi eq, %arg1, %c0_i32_8 : i32
    %14 = arith.andi %12, %13 : i1
    %15 = arith.extui %14 : i1 to i32
    %c0_i32_9 = arith.constant 0 : i32
    %16 = arith.cmpi ne, %15, %c0_i32_9 : i32
    scf.if %16 {
      %c0_12 = arith.constant 0 : index
      %c0_13 = arith.constant 0 : index
      %20 = vector.load %arg7[%c0_12, %c0_13] : memref<1x128xf32, #tpu.memory_space<vmem>>, vector<1x128xf32>
      %cst_14 = arith.constant 5.120000e+02 : f32
      %21 = vector.broadcast %cst_14 : f32 to vector<1x128xf32>
      %22 = arith.divf %20, %21 : vector<1x128xf32>
      %c0_15 = arith.constant 0 : index
      %c0_16 = arith.constant 0 : index
      %23 = vector.load %arg8[%c0_15, %c0_16] : memref<1x128xf32, #tpu.memory_space<vmem>>, vector<1x128xf32>
      %cst_17 = arith.constant 5.120000e+02 : f32
      %24 = vector.broadcast %cst_17 : f32 to vector<1x128xf32>
      %25 = arith.divf %23, %24 : vector<1x128xf32>
      %26 = arith.mulf %22, %22 : vector<1x128xf32>
      %27 = arith.subf %25, %26 : vector<1x128xf32>
      %cst_18 = arith.constant 0.000000e+00 : f32
      %28 = vector.broadcast %cst_18 : f32 to vector<1x128xf32>
      %29 = arith.maximumf %27, %28 : vector<1x128xf32>
      %cst_19 = arith.constant 9.99999974E-6 : f32
      %30 = vector.broadcast %cst_19 : f32 to vector<1x128xf32>
      %31 = arith.addf %29, %30 : vector<1x128xf32>
      %32 = math.rsqrt %31 : vector<1x128xf32>
      %c0_20 = arith.constant 0 : index
      %c0_21 = arith.constant 0 : index
      %33 = vector.load %arg4[%c0_20, %c0_21] : memref<1x128xf32, #tpu.memory_space<vmem>>, vector<1x128xf32>
      %34 = arith.mulf %33, %32 : vector<1x128xf32>
      %c0_22 = arith.constant 0 : index
      %c0_23 = arith.constant 0 : index
      %35 = vector.load %arg5[%c0_22, %c0_23] : memref<1x128xf32, #tpu.memory_space<vmem>>, vector<1x128xf32>
      %36 = arith.mulf %22, %34 : vector<1x128xf32>
      %37 = arith.subf %35, %36 : vector<1x128xf32>
      %c0_24 = arith.constant 0 : index
      %c0_25 = arith.constant 0 : index
      %38 = vector.load %arg7[%c0_24, %c0_25] : memref<1x128xf32, #tpu.memory_space<vmem>>, vector<1x128xf32>
      tpu.vector_store %arg7[%c0_24, %c0_25], %34 {strides = array<i32>} : memref<1x128xf32, #tpu.memory_space<vmem>>, vector<1x128xf32>,
      %c0_26 = arith.constant 0 : index
      %c0_27 = arith.constant 0 : index
      %39 = vector.load %arg8[%c0_26, %c0_27] : memref<1x128xf32, #tpu.memory_space<vmem>>, vector<1x128xf32>
      tpu.vector_store %arg8[%c0_26, %c0_27], %37 {strides = array<i32>} : memref<1x128xf32, #tpu.memory_space<vmem>>, vector<1x128xf32>,
    } else {
    }
    %c1_i32_10 = arith.constant 1 : i32
    %17 = arith.cmpi eq, %arg0, %c1_i32_10 : i32
    %18 = arith.extui %17 : i1 to i32
    %c0_i32_11 = arith.constant 0 : i32
    %19 = arith.cmpi ne, %18, %c0_i32_11 : i32
    scf.if %19 {
      %c0_12 = arith.constant 0 : index
      %c0_13 = arith.constant 0 : index
      %20 = vector.load %arg7[%c0_12, %c0_13] : memref<1x128xf32, #tpu.memory_space<vmem>>, vector<1x128xf32>
      %21 = vector.broadcast %20 : vector<1x128xf32> to vector<256x128xf32>
      %22 = arith.mulf %3, %21 : vector<256x128xf32>
      %c0_14 = arith.constant 0 : index
      %c0_15 = arith.constant 0 : index
      %23 = vector.load %arg8[%c0_14, %c0_15] : memref<1x128xf32, #tpu.memory_space<vmem>>, vector<1x128xf32>
      %24 = vector.broadcast %23 : vector<1x128xf32> to vector<256x128xf32>
      %25 = arith.addf %22, %24 : vector<256x128xf32>
      %26 = vector.extract_strided_slice %25 {offsets = [0, 0], sizes = [64, 128], strides = [1, 1]} : vector<256x128xf32> to vector<64x128xf32>
      %27 = vector.extract_strided_slice %25 {offsets = [64, 0], sizes = [64, 128], strides = [1, 1]} : vector<256x128xf32> to vector<64x128xf32>
      %28 = arith.maximumf %26, %27 : vector<64x128xf32>
      %29 = vector.extract_strided_slice %25 {offsets = [128, 0], sizes = [64, 128], strides = [1, 1]} : vector<256x128xf32> to vector<64x128xf32>
      %30 = vector.extract_strided_slice %25 {offsets = [192, 0], sizes = [64, 128], strides = [1, 1]} : vector<256x128xf32> to vector<64x128xf32>
      %31 = arith.maximumf %29, %30 : vector<64x128xf32>
      %32 = arith.maximumf %28, %31 : vector<64x128xf32>
      %cst_16 = arith.constant 0.000000e+00 : f32
      %33 = vector.broadcast %cst_16 : f32 to vector<64x128xf32>
      %34 = arith.maximumf %32, %33 : vector<64x128xf32>
      %c0_17 = arith.constant 0 : index
      %c0_18 = arith.constant 0 : index
      %35 = vector.load %arg6[%c0_17, %c0_18] : memref<64x128xf32, #tpu.memory_space<vmem>>, vector<64x128xf32>
      tpu.vector_store %arg6[%c0_17, %c0_18], %34 {strides = array<i32>} : memref<64x128xf32, #tpu.memory_space<vmem>>, vector<64x128xf32>,
    } else {
    }
    return
  }
  func.func @transform_0(%arg0: i32, %arg1: i32) -> (i32, i32, i32) {
    %c0_i32 = arith.constant 0 : i32
    %c0_i32_0 = arith.constant 0 : i32
    %c0_i32_1 = arith.constant 0 : i32
    return %c0_i32, %arg1, %c0_i32_0 : i32, i32, i32
  }
  func.func @transform_1(%arg0: i32, %arg1: i32) -> (i32, i32) {
    %c0_i32 = arith.constant 0 : i32
    %c0_i32_0 = arith.constant 0 : i32
    %c0_i32_1 = arith.constant 0 : i32
    return %c0_i32, %c0_i32_0 : i32, i32
  }
  func.func @transform_2(%arg0: i32, %arg1: i32) -> (i32, i32) {
    %c0_i32 = arith.constant 0 : i32
    %c0_i32_0 = arith.constant 0 : i32
    %c0_i32_1 = arith.constant 0 : i32
    return %c0_i32, %c0_i32_0 : i32, i32
  }
  func.func @transform_3(%arg0: i32, %arg1: i32) -> (i32, i32) {
    %c0_i32 = arith.constant 0 : i32
    %c0_i32_0 = arith.constant 0 : i32
    %c0_i32_1 = arith.constant 0 : i32
    return %c0_i32, %c0_i32_0 : i32, i32
  }
  func.func @transform_4(%arg0: i32, %arg1: i32) -> (i32, i32) {
    %0 = arith.muli %arg0, %arg1 : i32
    %c0_i32 = arith.constant 0 : i32
    %c0_i32_0 = arith.constant 0 : i32
    return %0, %c0_i32 : i32, i32
  }
}

</mosaic_0001>

<llo_original>
// kernel: tpu_custom_call.1
$region0: #{tpu_custom_call.1}
  #allocation0 [shape = 'u32[]', space=smem, size = 0x4, offset = 0x4, fixed_abs, tag = 'smem constant byte address 0x4 - core index']
  #allocation1 [shape = 'u32[144,128]{1,0:T(1,128)}', space=vmem, size = 0x12000, scoped, tag = 'internal scratch']
  #allocation2 [shape = 'f32[1,128]{1,0:T(1,128)}', space=vmem, size = 0x200, scoped, tag = 'scratch operand']
  #allocation3 [shape = 'f32[1,128]{1,0:T(1,128)}', space=vmem, size = 0x200, scoped, tag = 'scratch operand']
  %s0 = inlined_call_operand.vmem [shape: bf16[4,128,36], index: 0, kind: input, shape index: {}]
  %s1 = inlined_call_operand.vmem [shape: bf16[36,128], index: 1, kind: input, shape index: {}]
  %s2 = inlined_call_operand.vmem [shape: f32[1,128], index: 2, kind: input, shape index: {}]
  %s3 = inlined_call_operand.vmem [shape: f32[1,128], index: 3, kind: input, shape index: {}]
  %s4 = inlined_call_operand.hbm [shape: f32[128,128], index: 4, kind: output, shape index: {}]
  %s5 = sld [smem:[#allocation0]]
  $region106: #{tpu_custom_call.1} parent=0
    _
  %s7 = ssub.s32 1, %s5
  %s8 = scalar_select 0, %s7, %s5
  $region1: #{tpu_custom_call.1} parent=0
    #allocation4 [shape = 'u8[131072]{0}', space=vmem, size = 0x20000, scoped, tag = 'input window, operand 0']
    #allocation5 [shape = 'u8[65536]{0}', space=vmem, size = 0x10000, scoped, tag = 'output window, operand 0']
    #allocation6 [shape = 's32[2]{0}', space=sflag, size = 0x8, scoped, tag = 'scoped memory for tpu_custom_call.1']
    %9 = vsyncpa [#allocation6], 0
    %s10 = scalar_lea.sflag [#allocation6], 1
    %11 = vsyncpa %s10, 0
    loop: start=0, step=1, limit=6
    $region2: #{tpu_custom_call.1} parent=1 // loop_pre_header
      _
    $region3: #{tpu_custom_call.1} parent=1 // loop_header
      %s13 = sphi 0, %s17
      %p14 = scmp.ge.s32.totalorder %s13, 6
      %s20 = sphi 0, %s32
      %s21 = sphi 0, %s28
      %s22 = sphi 0, %s20
      %s23 = sphi 0, %s21
      %s24 = sphi 0, %s22
      %s25 = sphi 0, %s23
      %s35 = sphi 0, %s37
      %s38 = sphi 0, %s35
      %s39 = sphi 0, %s38
      %s55 = sphi 0, %s39
      %s59 = sphi 0, %s59
      %s61 = sphi 0, %s59
      %s62 = sphi 0, %s61
      %s76 = sphi 0, %s62
      %s80 = sphi 0, %s80
      %s82 = sphi 0, %s80
      %s83 = sphi 0, %s82
      %s97 = sphi 0, %s83
      %s101 = sphi 0, %s101
      %s103 = sphi 0, %s101
      %s104 = sphi 0, %s103
      %s118 = sphi 0, %s104
      %s126 = sphi 0, %s128
      %s129 = sphi 0, %s126
      %s130 = sphi 0, %s129
      %s146 = sphi 0, %s130
    $region4: #{tpu_custom_call.1} parent=1 // loop_header_branch
      %16 = sbr.rel (%p14) target = $region8
    $region5: #{tpu_custom_call.1} parent=1 // loop_body
      %s18 = ssub.s32 %s13, 1
      %s19 = ssub.s32 %s13, 2
      %s26 = sadd.s32 1, %s21
      %p27 = scmp.ge.s32.totalorder %s26, 2
      %s28 = scalar_select %p27, 0, %s26
      %s29 = sadd.s32 1, %s20
      %s30 = scalar_select %p27, %s29, %s20
      %p31 = scmp.ge.s32.totalorder %s30, 2
      %s32 = scalar_select %p31, 0, %s30
      %s33 = ssub.s32 %s21, %s28
      %p34 = scmp.eq.s32.totalorder %s33, 0
      %s36 = sadd.s32 %s35, 1
      %s37 = scalar_select %p34, %s35, %s36
      %p40 = pneg %p34
      %p41 = scmp.eq.s32.totalorder %s13, 3
      %p42 = por %p40, %p41
      %p43 = scmp.ne.s32.totalorder %s35, %s38
      %p44 = scmp.eq.s32.totalorder %s13, 0
      %p45 = por %p43, %p44
      %p46 = scmp.ne.s32.totalorder %s35, %s38
      %p47 = scmp.eq.s32.totalorder %s18, 3
      %p48 = por %p46, %p47
      %p49 = scmp.ne.s32.totalorder %s38, %s39
      %p50 = scmp.eq.s32.totalorder %s18, 0
      %p51 = por %p49, %p50
      %p52 = scmp.ne.s32.totalorder %s38, %s39
      %p53 = scmp.eq.s32.totalorder %s19, 3
      %p54 = por %p52, %p53
      %p56 = scmp.ne.s32.totalorder %s39, %s55
      %p57 = scmp.eq.s32.totalorder %s19, 0
      %p58 = por %p56, %p57
      %s60 = sadd.s32 %s59, 1
      %p63 = scmp.eq.s32.totalorder %s13, 3
      %p64 = scmp.ne.s32.totalorder %s59, %s61
      %p65 = scmp.eq.s32.totalorder %s13, 0
      %p66 = por %p64, %p65
      %p67 = scmp.ne.s32.totalorder %s59, %s61
      %p68 = scmp.eq.s32.totalorder %s18, 3
      %p69 = por %p67, %p68
      %p70 = scmp.ne.s32.totalorder %s61, %s62
      %p71 = scmp.eq.s32.totalorder %s18, 0
      %p72 = por %p70, %p71
      %p73 = scmp.ne.s32.totalorder %s61, %s62
      %p74 = scmp.eq.s32.totalorder %s19, 3
      %p75 = por %p73, %p74
      %p77 = scmp.ne.s32.totalorder %s62, %s76
      %p78 = scmp.eq.s32.totalorder %s19, 0
      %p79 = por %p77, %p78
      %s81 = sadd.s32 %s80, 1
      %p84 = scmp.eq.s32.totalorder %s13, 3
      %p85 = scmp.ne.s32.totalorder %s80, %s82
      %p86 = scmp.eq.s32.totalorder %s13, 0
      %p87 = por %p85, %p86
      %p88 = scmp.ne.s32.totalorder %s80, %s82
      %p89 = scmp.eq.s32.totalorder %s18, 3
      %p90 = por %p88, %p89
      %p91 = scmp.ne.s32.totalorder %s82, %s83
      %p92 = scmp.eq.s32.totalorder %s18, 0
      %p93 = por %p91, %p92
      %p94 = scmp.ne.s32.totalorder %s82, %s83
      %p95 = scmp.eq.s32.totalorder %s19, 3
      %p96 = por %p94, %p95
      %p98 = scmp.ne.s32.totalorder %s83, %s97
      %p99 = scmp.eq.s32.totalorder %s19, 0
      %p100 = por %p98, %p99
      %s102 = sadd.s32 %s101, 1
      %p105 = scmp.eq.s32.totalorder %s13, 3
      %p106 = scmp.ne.s32.totalorder %s101, %s103
      %p107 = scmp.eq.s32.totalorder %s13, 0
      %p108 = por %p106, %p107
      %p109 = scmp.ne.s32.totalorder %s101, %s103
      %p110 = scmp.eq.s32.totalorder %s18, 3
      %p111 = por %p109, %p110
      %p112 = scmp.ne.s32.totalorder %s103, %s104
      %p113 = scmp.eq.s32.totalorder %s18, 0
      %p114 = por %p112, %p113
      %p115 = scmp.ne.s32.totalorder %s103, %s104
      %p116 = scmp.eq.s32.totalorder %s19, 3
      %p117 = por %p115, %p116
      %p119 = scmp.ne.s32.totalorder %s104, %s118
      %p120 = scmp.eq.s32.totalorder %s19, 0
      %p121 = por %p119, %p120
      %s122 = smul.u32 %s20, %s21
      %s123 = smul.u32 %s32, %s28
      %s124 = ssub.s32 %s122, %s123
      %p125 = scmp.eq.s32.totalorder %s124, 0
      %s127 = sadd.s32 %s126, 1
      %s128 = scalar_select %p125, %s126, %s127
      %p131 = pneg %p125
      %p132 = scmp.eq.s32.totalorder %s13, 3
      %p133 = por %p131, %p132
      %p134 = scmp.ne.s32.totalorder %s126, %s129
      %p135 = scmp.eq.s32.totalorder %s13, 0
      %p136 = por %p134, %p135
      %p137 = scmp.ne.s32.totalorder %s126, %s129
      %p138 = scmp.eq.s32.totalorder %s18, 3
      %p139 = por %p137, %p138
      %p140 = scmp.ne.s32.totalorder %s129, %s130
      %p141 = scmp.eq.s32.totalorder %s18, 0
      %p142 = por %p140, %p141
      %p143 = scmp.ne.s32.totalorder %s129, %s130
      %p144 = scmp.eq.s32.totalorder %s19, 3
      %p145 = por %p143, %p144
      %p147 = scmp.ne.s32.totalorder %s130, %s146
      %p148 = scmp.eq.s32.totalorder %s19, 0
      %p149 = por %p147, %p148
      %p150 = scmp.le.s32.totalorder 1, %s13
      %p151 = scmp.lt.s32.totalorder %s13, 5
      %p152 = pnand %p150, %p151
      %p153 = pneg %p152
      // Predicated region
      $region9: #{tpu_custom_call.1} parent=5 // pred_check
        _
      $region10: #{tpu_custom_call.1} parent=5 // pred_check_branch
        %155 = sbr.rel (%p152) target = $region12
      $region11: #{tpu_custom_call.1} parent=5 // pred_region
        %s156 = ssub.s32 %s13, 1
        // Predicated region
        $region13: #{tpu_custom_call.1} parent=11 // pred_check
          %p157 = pneg %p72
        $region14: #{tpu_custom_call.1} parent=11 // pred_check_branch
          %159 = sbr.rel (%p157) target = $region16
        $region15: #{tpu_custom_call.1} parent=11 // pred_region
          _
        $region16: #{tpu_custom_call.1} parent=11 // pred_fallthru
          _
        // Predicated region
        $region17: #{tpu_custom_call.1} parent=11 // pred_check
          %p160 = pneg %p93
        $region18: #{tpu_custom_call.1} parent=11 // pred_check_branch
          %162 = sbr.rel (%p160) target = $region20
        $region19: #{tpu_custom_call.1} parent=11 // pred_region
          _
        $region20: #{tpu_custom_call.1} parent=11 // pred_fallthru
          _
        // Predicated region
        $region21: #{tpu_custom_call.1} parent=11 // pred_check
          %p163 = pneg %p114
        $region22: #{tpu_custom_call.1} parent=11 // pred_check_branch
          %165 = sbr.rel (%p163) target = $region24
        $region23: #{tpu_custom_call.1} parent=11 // pred_region
          _
        $region24: #{tpu_custom_call.1} parent=11 // pred_fallthru
          _
      $region12: #{tpu_custom_call.1} parent=5 // pred_fallthru
        _
      %p166 = scmp.lt.s32.totalorder %s13, 4
      // Predicated region
      $region25: #{tpu_custom_call.1} parent=5 // pred_check
        %p167 = pneg %p166
      $region26: #{tpu_custom_call.1} parent=5 // pred_check_branch
        %169 = sbr.rel (%p167) target = $region28
      $region27: #{tpu_custom_call.1} parent=5 // pred_region
        // Predicated region
        $region29: #{tpu_custom_call.1} parent=27 // pred_check
          %p170 = pneg %p45
        $region30: #{tpu_custom_call.1} parent=27 // pred_check_branch
          %172 = sbr.rel (%p170) target = $region32
        $region31: #{tpu_custom_call.1} parent=27 // pred_region
          %s173 = sand.u32 %s35, 1
          %s174 = sand.u32 %s35, 1
          %s175 = smul.addr %s174, 128
          %s176 = scalar_lea.vmem [#allocation4], %s175
          %s177 = smul.u32 8, %s21
          %s178 = smul.addr %s177, 4
          %s179 = scalar_lea.vmem %s0, %s178
          // Predicated region
          $region33: #{tpu_custom_call.1} parent=31 // pred_check
            _
          $region34: #{tpu_custom_call.1} parent=31 // pred_check_branch
            %181 = sbr.rel (0) target = $region36
          $region35: #{tpu_custom_call.1} parent=31 // pred_region
            // Predicated region
            $region37: #{tpu_custom_call.1} parent=35 // pred_check
              _
            $region38: #{tpu_custom_call.1} parent=35 // pred_check_branch
              %183 = sbr.rel target = $region40
            $region39: #{tpu_custom_call.1} parent=35 // pred_region
              // Predicated region
              $region52: #{tpu_custom_call.1} parent=39 // pred_check
                _
              $region53: #{tpu_custom_call.1} parent=39 // pred_check_branch
                %260 = sbr.rel (0) target = $region55
              $region54: #{tpu_custom_call.1} parent=39 // pred_region
                loop: start=0, step=1, limit=1
                $region56: #{tpu_custom_call.1} parent=54 // loop_pre_header
                  _
                $region57: #{tpu_custom_call.1} parent=54 // loop_header
                  %s262 = sphi 0, %s266
                  %p263 = scmp.ge.s32.totalorder %s262, 1
                  %s267 = sphi %s179, %s179
                  %s268 = sphi %s176, %s176
                $region58: #{tpu_custom_call.1} parent=54 // loop_header_branch
                  %265 = sbr.rel (%p263) target = $region62
                $region59: #{tpu_custom_call.1} parent=54 // loop_body
                  _
                $region60: #{tpu_custom_call.1} parent=54 // loop_footer
                  %s266 = sadd.s32 1, %s262
                $region61: #{tpu_custom_call.1} parent=54 // loop_footer_branch
                  %261 = sbr.rel target = $region57
                $region62: #{tpu_custom_call.1} parent=54 // loop_exit
                  _
                loop: start=0, step=1, limit=1
                $region63: #{tpu_custom_call.1} parent=54 // loop_pre_header
                  _
                $region64: #{tpu_custom_call.1} parent=54 // loop_header
                  %s271 = sphi 0, %s275
                  %p272 = scmp.ge.s32.totalorder %s271, 1
                  %s276 = sphi %s179, %s179
                  %s277 = sphi %s176, %s176
                $region65: #{tpu_custom_call.1} parent=54 // loop_header_branch
                  %274 = sbr.rel (%p272) target = $region69
                $region66: #{tpu_custom_call.1} parent=54 // loop_body
                  %v278 = vld [vmem:[%s276] sm:$0xf]
                  %279 = vst [vmem:[%s277] sm:$0xf] %v278
                  %v280 = vld [vmem:[%s276 + $0x4] sm:$0xf]
                  %281 = vst [vmem:[%s277 + $0x4] sm:$0xf] %v280
                  %v282 = vld [vmem:[%s276 + $0x8] sm:$0xf]
                  %283 = vst [vmem:[%s277 + $0x8] sm:$0xf] %v282
                  %v284 = vld [vmem:[%s276 + $0xc] sm:$0xf]
                  %285 = vst [vmem:[%s277 + $0xc] sm:$0xf] %v284
                  %v286 = vld [vmem:[%s276 + $0x10] sm:$0xf]
                  %287 = vst [vmem:[%s277 + $0x10] sm:$0xf] %v286
                  %v288 = vld [vmem:[%s276 + $0x14] sm:$0xf]
                  %289 = vst [vmem:[%s277 + $0x14] sm:$0xf] %v288
                  %v290 = vld [vmem:[%s276 + $0x18] sm:$0xf]
                  %291 = vst [vmem:[%s277 + $0x18] sm:$0xf] %v290
                  %v292 = vld [vmem:[%s276 + $0x1c] sm:$0xf]
                  %293 = vst [vmem:[%s277 + $0x1c] sm:$0xf] %v292
                  %v294 = vld [vmem:[%s276 + $0x40] sm:$0xf]
                  %295 = vst [vmem:[%s277 + $0x20] sm:$0xf] %v294
                  %v296 = vld [vmem:[%s276 + $0x44] sm:$0xf]
                  %297 = vst [vmem:[%s277 + $0x24] sm:$0xf] %v296
                  %v298 = vld [vmem:[%s276 + $0x48] sm:$0xf]
                  %299 = vst [vmem:[%s277 + $0x28] sm:$0xf] %v298
                  %v300 = vld [vmem:[%s276 + $0x4c] sm:$0xf]
                  %301 = vst [vmem:[%s277 + $0x2c] sm:$0xf] %v300
                  %v302 = vld [vmem:[%s276 + $0x50] sm:$0xf]
                  %303 = vst [vmem:[%s277 + $0x30] sm:$0xf] %v302
                  %v304 = vld [vmem:[%s276 + $0x54] sm:$0xf]
                  %305 = vst [vmem:[%s277 + $0x34] sm:$0xf] %v304
                  %v306 = vld [vmem:[%s276 + $0x58] sm:$0xf]
                  %307 = vst [vmem:[%s277 + $0x38] sm:$0xf] %v306
                  %v308 = vld [vmem:[%s276 + $0x5c] sm:$0xf]
                  %309 = vst [vmem:[%s277 + $0x3c] sm:$0xf] %v308
                  %v310 = vld [vmem:[%s276 + $0x80] sm:$0xf]
                  %311 = vst [vmem:[%s277 + $0x40] sm:$0xf] %v310
                  %v312 = vld [vmem:[%s276 + $0x84] sm:$0xf]
                  %313 = vst [vmem:[%s277 + $0x44] sm:$0xf] %v312
                  %v314 = vld [vmem:[%s276 + $0x88] sm:$0xf]
                  %315 = vst [vmem:[%s277 + $0x48] sm:$0xf] %v314
                  %v316 = vld [vmem:[%s276 + $0x8c] sm:$0xf]
                  %317 = vst [vmem:[%s277 + $0x4c] sm:$0xf] %v316
                  %v318 = vld [vmem:[%s276 + $0x90] sm:$0xf]
                  %319 = vst [vmem:[%s277 + $0x50] sm:$0xf] %v318
                  %v320 = vld [vmem:[%s276 + $0x94] sm:$0xf]
                  %321 = vst [vmem:[%s277 + $0x54] sm:$0xf] %v320
                  %v322 = vld [vmem:[%s276 + $0x98] sm:$0xf]
                  %323 = vst [vmem:[%s277 + $0x58] sm:$0xf] %v322
                  %v324 = vld [vmem:[%s276 + $0x9c] sm:$0xf]
                  %325 = vst [vmem:[%s277 + $0x5c] sm:$0xf] %v324
                  %v326 = vld [vmem:[%s276 + $0xc0] sm:$0xf]
                  %327 = vst [vmem:[%s277 + $0x60] sm:$0xf] %v326
                  %v328 = vld [vmem:[%s276 + $0xc4] sm:$0xf]
                  %329 = vst [vmem:[%s277 + $0x64] sm:$0xf] %v328
                  %v330 = vld [vmem:[%s276 + $0xc8] sm:$0xf]
                  %331 = vst [vmem:[%s277 + $0x68] sm:$0xf] %v330
                  %v332 = vld [vmem:[%s276 + $0xcc] sm:$0xf]
                  %333 = vst [vmem:[%s277 + $0x6c] sm:$0xf] %v332
                  %v334 = vld [vmem:[%s276 + $0xd0] sm:$0xf]
                  %335 = vst [vmem:[%s277 + $0x70] sm:$0xf] %v334
                  %v336 = vld [vmem:[%s276 + $0xd4] sm:$0xf]
                  %337 = vst [vmem:[%s277 + $0x74] sm:$0xf] %v336
                  %v338 = vld [vmem:[%s276 + $0xd8] sm:$0xf]
                  %339 = vst [vmem:[%s277 + $0x78] sm:$0xf] %v338
                  %v340 = vld [vmem:[%s276 + $0xdc] sm:$0xf]
                  %341 = vst [vmem:[%s277 + $0x7c] sm:$0xf] %v340
                $region67: #{tpu_custom_call.1} parent=54 // loop_footer
                  %s275 = sadd.s32 1, %s271
                $region68: #{tpu_custom_call.1} parent=54 // loop_footer_branch
                  %270 = sbr.rel target = $region64
                $region69: #{tpu_custom_call.1} parent=54 // loop_exit
                  _
              $region55: #{tpu_custom_call.1} parent=39 // pred_fallthru
                _
            $region40: #{tpu_custom_call.1} parent=35 // pred_fallthru
              _
            // Predicated region
            $region41: #{tpu_custom_call.1} parent=35 // pred_check
              _
            $region42: #{tpu_custom_call.1} parent=35 // pred_check_branch
              %185 = sbr.rel (0) target = $region44
            $region43: #{tpu_custom_call.1} parent=35 // pred_region
              loop: start=0, step=1, limit=1
              $region45: #{tpu_custom_call.1} parent=43 // loop_pre_header
                _
              $region46: #{tpu_custom_call.1} parent=43 // loop_header
                %s188 = sphi 0, %s192
                %p189 = scmp.ge.s32.totalorder %s188, 1
                %s193 = sphi %s179, %s179
                %s194 = sphi %s176, %s176
              $region47: #{tpu_custom_call.1} parent=43 // loop_header_branch
                %191 = sbr.rel (%p189) target = $region51
              $region48: #{tpu_custom_call.1} parent=43 // loop_body
                %v195 = vld [vmem:[%s193] sm:$0xf]
                %196 = vst [vmem:[%s194] sm:$0xf] %v195
                %v197 = vld [vmem:[%s193 + $0x4] sm:$0xf]
                %198 = vst [vmem:[%s194 + $0x4] sm:$0xf] %v197
                %v199 = vld [vmem:[%s193 + $0x8] sm:$0xf]
                %200 = vst [vmem:[%s194 + $0x8] sm:$0xf] %v199
                %v201 = vld [vmem:[%s193 + $0xc] sm:$0xf]
                %202 = vst [vmem:[%s194 + $0xc] sm:$0xf] %v201
                %v203 = vld [vmem:[%s193 + $0x10] sm:$0xf]
                %204 = vst [vmem:[%s194 + $0x10] sm:$0xf] %v203
                %v205 = vld [vmem:[%s193 + $0x14] sm:$0xf]
                %206 = vst [vmem:[%s194 + $0x14] sm:$0xf] %v205
                %v207 = vld [vmem:[%s193 + $0x18] sm:$0xf]
                %208 = vst [vmem:[%s194 + $0x18] sm:$0xf] %v207
                %v209 = vld [vmem:[%s193 + $0x1c] sm:$0xf]
                %210 = vst [vmem:[%s194 + $0x1c] sm:$0xf] %v209
                %v211 = vld [vmem:[%s193 + $0x40] sm:$0xf]
                %212 = vst [vmem:[%s194 + $0x20] sm:$0xf] %v211
                %v213 = vld [vmem:[%s193 + $0x44] sm:$0xf]
                %214 = vst [vmem:[%s194 + $0x24] sm:$0xf] %v213
                %v215 = vld [vmem:[%s193 + $0x48] sm:$0xf]
                %216 = vst [vmem:[%s194 + $0x28] sm:$0xf] %v215
                %v217 = vld [vmem:[%s193 + $0x4c] sm:$0xf]
                %218 = vst [vmem:[%s194 + $0x2c] sm:$0xf] %v217
                %v219 = vld [vmem:[%s193 + $0x50] sm:$0xf]
                %220 = vst [vmem:[%s194 + $0x30] sm:$0xf] %v219
                %v221 = vld [vmem:[%s193 + $0x54] sm:$0xf]
                %222 = vst [vmem:[%s194 + $0x34] sm:$0xf] %v221
                %v223 = vld [vmem:[%s193 + $0x58] sm:$0xf]
                %224 = vst [vmem:[%s194 + $0x38] sm:$0xf] %v223
                %v225 = vld [vmem:[%s193 + $0x5c] sm:$0xf]
                %226 = vst [vmem:[%s194 + $0x3c] sm:$0xf] %v225
                %v227 = vld [vmem:[%s193 + $0x80] sm:$0xf]
                %228 = vst [vmem:[%s194 + $0x40] sm:$0xf] %v227
                %v229 = vld [vmem:[%s193 + $0x84] sm:$0xf]
                %230 = vst [vmem:[%s194 + $0x44] sm:$0xf] %v229
                %v231 = vld [vmem:[%s193 + $0x88] sm:$0xf]
                %232 = vst [vmem:[%s194 + $0x48] sm:$0xf] %v231
                %v233 = vld [vmem:[%s193 + $0x8c] sm:$0xf]
                %234 = vst [vmem:[%s194 + $0x4c] sm:$0xf] %v233
                %v235 = vld [vmem:[%s193 + $0x90] sm:$0xf]
                %236 = vst [vmem:[%s194 + $0x50] sm:$0xf] %v235
                %v237 = vld [vmem:[%s193 + $0x94] sm:$0xf]
                %238 = vst [vmem:[%s194 + $0x54] sm:$0xf] %v237
                %v239 = vld [vmem:[%s193 + $0x98] sm:$0xf]
                %240 = vst [vmem:[%s194 + $0x58] sm:$0xf] %v239
                %v241 = vld [vmem:[%s193 + $0x9c] sm:$0xf]
                %242 = vst [vmem:[%s194 + $0x5c] sm:$0xf] %v241
                %v243 = vld [vmem:[%s193 + $0xc0] sm:$0xf]
                %244 = vst [vmem:[%s194 + $0x60] sm:$0xf] %v243
                %v245 = vld [vmem:[%s193 + $0xc4] sm:$0xf]
                %246 = vst [vmem:[%s194 + $0x64] sm:$0xf] %v245
                %v247 = vld [vmem:[%s193 + $0xc8] sm:$0xf]
                %248 = vst [vmem:[%s194 + $0x68] sm:$0xf] %v247
                %v249 = vld [vmem:[%s193 + $0xcc] sm:$0xf]
                %250 = vst [vmem:[%s194 + $0x6c] sm:$0xf] %v249
                %v251 = vld [vmem:[%s193 + $0xd0] sm:$0xf]
                %252 = vst [vmem:[%s194 + $0x70] sm:$0xf] %v251
                %v253 = vld [vmem:[%s193 + $0xd4] sm:$0xf]
                %254 = vst [vmem:[%s194 + $0x74] sm:$0xf] %v253
                %v255 = vld [vmem:[%s193 + $0xd8] sm:$0xf]
                %256 = vst [vmem:[%s194 + $0x78] sm:$0xf] %v255
                %v257 = vld [vmem:[%s193 + $0xdc] sm:$0xf]
                %258 = vst [vmem:[%s194 + $0x7c] sm:$0xf] %v257
              $region49: #{tpu_custom_call.1} parent=43 // loop_footer
                %s192 = sadd.s32 1, %s188
              $region50: #{tpu_custom_call.1} parent=43 // loop_footer_branch
                %187 = sbr.rel target = $region46
              $region51: #{tpu_custom_call.1} parent=43 // loop_exit
                _
            $region44: #{tpu_custom_call.1} parent=35 // pred_fallthru
              _
          $region36: #{tpu_custom_call.1} parent=31 // pred_fallthru
            _
          %342 = vnop
        $region32: #{tpu_custom_call.1} parent=27 // pred_fallthru
          _
      $region28: #{tpu_custom_call.1} parent=5 // pred_fallthru
        _
      %p343 = scmp.le.s32.totalorder 1, %s13
      %p344 = scmp.lt.s32.totalorder %s13, 5
      %p345 = pnand %p343, %p344
      %p346 = pneg %p345
      // Predicated region
      $region70: #{tpu_custom_call.1} parent=5 // pred_check
        _
      $region71: #{tpu_custom_call.1} parent=5 // pred_check_branch
        %348 = sbr.rel (%p345) target = $region73
      $region72: #{tpu_custom_call.1} parent=5 // pred_region
        %s349 = ssub.s32 %s13, 1
        %s350 = sand.u32 %s38, 1
        %s351 = sand.u32 %s38, 1
        %s352 = smul.addr %s351, 128
        %s353 = scalar_lea.vmem [#allocation4], %s352
        // Predicated region
        $region74: #{tpu_custom_call.1} parent=72 // pred_check
          %p354 = pneg %p51
        $region75: #{tpu_custom_call.1} parent=72 // pred_check_branch
          %356 = sbr.rel (%p354) target = $region77
        $region76: #{tpu_custom_call.1} parent=72 // pred_region
          _
        $region77: #{tpu_custom_call.1} parent=72 // pred_fallthru
          _
        %s357 = sand.u32 %s38, 1
        %s358 = sand.u32 %s38, 1
        %s359 = smul.addr %s358, 128
        %s360 = scalar_lea.vmem [#allocation4], %s359
        %p361 = pneg %p51
        %p362 = pneg %p48
        %p363 = pneg %p72
        %p364 = pneg %p69
        %p365 = pneg %p93
        %p366 = pneg %p90
        %p367 = pneg %p114
        %p368 = pneg %p111
        %p369 = pneg %p142
        %p370 = pneg %p139
        %s371 = sand.u32 %s129, 1
        %s372 = scalar_lea.sflag [#allocation6], %s371
        %s373 = sand.u32 %s129, 1
        %s374 = smul.addr %s373, 64
        %s375 = scalar_lea.vmem [#allocation5], %s374
        %s376 = smul.u32 8, %s23
        %s377 = smul.u32 %s22, %s23
        %s378 = smul.u32 8, %s377
        %v380 = vld [vmem:[%s353] sm:$0xf]
        %v381 = vld [vmem:[%s353 + $0x4] sm:$0xf]
        %v382 = vld [vmem:[%s353 + $0x8] sm:$0xf]
        %v383 = vld [vmem:[%s353 + $0xc] sm:$0xf]
        %v384 = vld [vmem:[%s353 + $0x10] sm:$0xf]
        %v385 = vld [vmem:[%s353 + $0x14] sm:$0xf]
        %v386 = vld [vmem:[%s353 + $0x18] sm:$0xf]
        %v387 = vld [vmem:[%s353 + $0x1c] sm:$0xf]
        %v388 = vld [vmem:[%s353 + $0x20] sm:$0xf]
        %v389 = vld [vmem:[%s353 + $0x24] sm:$0xf]
        %v390 = vld [vmem:[%s353 + $0x28] sm:$0xf]
        %v391 = vld [vmem:[%s353 + $0x2c] sm:$0xf]
        %v392 = vld [vmem:[%s353 + $0x30] sm:$0xf]
        %v393 = vld [vmem:[%s353 + $0x34] sm:$0xf]
        %v394 = vld [vmem:[%s353 + $0x38] sm:$0xf]
        %v395 = vld [vmem:[%s353 + $0x3c] sm:$0xf]
        %v396 = vld [vmem:[%s353 + $0x40] sm:$0xf]
        %v397 = vld [vmem:[%s353 + $0x44] sm:$0xf]
        %v398 = vld [vmem:[%s353 + $0x48] sm:$0xf]
        %v399 = vld [vmem:[%s353 + $0x4c] sm:$0xf]
        %v400 = vld [vmem:[%s353 + $0x50] sm:$0xf]
        %v401 = vld [vmem:[%s353 + $0x54] sm:$0xf]
        %v402 = vld [vmem:[%s353 + $0x58] sm:$0xf]
        %v403 = vld [vmem:[%s353 + $0x5c] sm:$0xf]
        %v404 = vld [vmem:[%s353 + $0x60] sm:$0xf]
        %v405 = vld [vmem:[%s353 + $0x64] sm:$0xf]
        %v406 = vld [vmem:[%s353 + $0x68] sm:$0xf]
        %v407 = vld [vmem:[%s353 + $0x6c] sm:$0xf]
        %v408 = vld [vmem:[%s353 + $0x70] sm:$0xf]
        %v409 = vld [vmem:[%s353 + $0x74] sm:$0xf]
        %v410 = vld [vmem:[%s353 + $0x78] sm:$0xf]
        %v411 = vld [vmem:[%s353 + $0x7c] sm:$0xf]
        %v412 = vld [vmem:[%s1] sm:$0xf]
        %v413 = vld [vmem:[%s1 + $0x4] sm:$0xf]
        %v414 = vld [vmem:[%s1 + $0x8] sm:$0xf]
        %v415 = vld [vmem:[%s1 + $0xc] sm:$0xf]
        %v416 = vld [vmem:[%s1 + $0x10] sm:$0x3]
        %v449 = vunpack.c.l.b16 %v380
        %v450 = vunpack.c.l.b16 %v381
        %v451 = vunpack.c.l.b16 %v382
        %v452 = vunpack.c.l.b16 %v383
        %v453 = vunpack.c.l.b16 %v384
        %v454 = vunpack.c.l.b16 %v385
        %v455 = vunpack.c.l.b16 %v386
        %v456 = vunpack.c.l.b16 %v387
        %v457 = vunpack.c.l.b16 %v388
        %v458 = vunpack.c.l.b16 %v389
        %v459 = vunpack.c.l.b16 %v390
        %v460 = vunpack.c.l.b16 %v391
        %v461 = vunpack.c.l.b16 %v392
        %v462 = vunpack.c.l.b16 %v393
        %v463 = vunpack.c.l.b16 %v394
        %v464 = vunpack.c.l.b16 %v395
        %v465 = vunpack.c.l.b16 %v396
        %v466 = vunpack.c.l.b16 %v397
        %v467 = vunpack.c.l.b16 %v398
        %v468 = vunpack.c.l.b16 %v399
        %v469 = vunpack.c.l.b16 %v400
        %v470 = vunpack.c.l.b16 %v401
        %v471 = vunpack.c.l.b16 %v402
        %v472 = vunpack.c.l.b16 %v403
        %v473 = vunpack.c.l.b16 %v404
        %v474 = vunpack.c.l.b16 %v405
        %v475 = vunpack.c.l.b16 %v406
        %v476 = vunpack.c.l.b16 %v407
        %v477 = vunpack.c.l.b16 %v408
        %v478 = vunpack.c.l.b16 %v409
        %v479 = vunpack.c.l.b16 %v410
        %v480 = vunpack.c.l.b16 %v411
        %v481 = vpack.c.b16 %v450, %v449
        %v482 = vpack.c.b16 %v452, %v451
        %v483 = vpack.c.b16 %v454, %v453
        %v484 = vpack.c.b16 %v456, %v455
        %v485 = vpack.c.b16 %v458, %v457
        %v486 = vpack.c.b16 %v460, %v459
        %v487 = vpack.c.b16 %v462, %v461
        %v488 = vpack.c.b16 %v464, %v463
        %v489 = vpack.c.b16 %v466, %v465
        %v490 = vpack.c.b16 %v468, %v467
        %v491 = vpack.c.b16 %v470, %v469
        %v492 = vpack.c.b16 %v472, %v471
        %v493 = vpack.c.b16 %v474, %v473
        %v494 = vpack.c.b16 %v476, %v475
        %v495 = vpack.c.b16 %v478, %v477
        %v496 = vpack.c.b16 %v480, %v479
        %v502 = vunpack.c.l.b16 %v412
        %v503 = vunpack.c.l.b16 %v413
        %v504 = vunpack.c.l.b16 %v414
        %v505 = vunpack.c.l.b16 %v415
        %v506 = vunpack.c.l.b16 %v416
        %v507 = vpack.c.b16 %v503, %v502
        %v508 = vpack.c.b16 %v505, %v504
        %v509 = vpack.c.b16 %v506, %v506
        %vm512 = vcmask 293888
        %v514 = vsel %vm512, %v481, 0
        %v517 = vsel %vm512, %v482, 0
        %v520 = vsel %vm512, %v483, 0
        %v523 = vsel %vm512, %v484, 0
        %v526 = vsel %vm512, %v485, 0
        %v529 = vsel %vm512, %v486, 0
        %v532 = vsel %vm512, %v487, 0
        %v535 = vsel %vm512, %v488, 0
        %v538 = vsel %vm512, %v489, 0
        %v541 = vsel %vm512, %v490, 0
        %v544 = vsel %vm512, %v491, 0
        %v547 = vsel %vm512, %v492, 0
        %v550 = vsel %vm512, %v493, 0
        %v553 = vsel %vm512, %v494, 0
        %v556 = vsel %vm512, %v495, 0
        %v559 = vsel %vm512, %v496, 0
        %vm561 = vcmask 1041408
        %v563 = vsel %vm561, %v509, 0
        %565 = vmatprep.subr.bf16.mxu0 0
        %566 = vmatpush1.bf16.msra.mxu0 %v507
        %567 = vmatprep.subr.bf16.mxu0 0
        %568 = vmatpush1.bf16.msra.mxu0 %v508
        %569 = vmatprep.subr.bf16.mxu0 0
        %570 = vmatpush1.bf16.msra.mxu0 %v563
        %571 = vmatprep.subr.bf16.mxu0 0
        %572 = vmatpush1.bf16.msra.mxu0 0
        %573 = vmatprep.subr.bf16.mxu0 0
        %574 = vmatpush1.bf16.msra.mxu0 0
        %575 = vmatprep.subr.bf16.mxu0 0
        %576 = vmatpush1.bf16.msra.mxu0 0
        %577 = vmatprep.subr.bf16.mxu0 0
        %578 = vmatpush1.bf16.msra.mxu0 0
        %579 = vmatprep.subr.bf16.mxu0 0
        %580 = vmatpush1.bf16.msra.mxu0 0
        %581 = vmatprep.subr.bf16.mxu0 0
        %582 = vmatpush1.bf16.msra.mxu0 0
        %583 = vmatprep.subr.bf16.mxu0 0
        %584 = vmatpush1.bf16.msra.mxu0 0
        %585 = vmatprep.subr.bf16.mxu0 0
        %586 = vmatpush1.bf16.msra.mxu0 0
        %587 = vmatprep.subr.bf16.mxu0 0
        %588 = vmatpush1.bf16.msra.mxu0 0
        %589 = vmatprep.subr.bf16.mxu0 0
        %590 = vmatpush1.bf16.msra.mxu0 0
        %591 = vmatprep.subr.bf16.mxu0 0
        %592 = vmatpush1.bf16.msra.mxu0 0
        %593 = vmatprep.subr.bf16.mxu0 0
        %594 = vmatpush1.bf16.msra.mxu0 0
        %595 = vmatprep.subr.bf16.mxu0 0
        %596 = vmatpush1.bf16.msra.mxu0 0
        %597 = vmatprep.mubr.bf16.mxu0 0
        %598 = vmatmul.mubr.bf16.gmra.mrb[0].mxu0 %v514
        %v599 = vpop.f32.mrb[0].mxu0
        %v600 = vadd.f32 0.0, %v599
        %v601 = vpop.f32.mrb[0].mxu0
        %v602 = vpop.f32.mrb[0].mxu0
        %v603 = vadd.f32 0.0, %v602
        %v604 = vpop.f32.mrb[0].mxu0
        %605 = vmatprep.mubr.bf16.mxu0 0
        %606 = vmatmul.mubr.bf16.gmra.mrb[0].mxu0 %v517
        %v607 = vpop.f32.mrb[0].mxu0
        %v608 = vadd.f32 0.0, %v607
        %v609 = vpop.f32.mrb[0].mxu0
        %v610 = vpop.f32.mrb[0].mxu0
        %v611 = vadd.f32 0.0, %v610
        %v612 = vpop.f32.mrb[0].mxu0
        %613 = vmatprep.mubr.bf16.mxu0 0
        %614 = vmatmul.mubr.bf16.gmra.mrb[0].mxu0 %v520
        %v615 = vpop.f32.mrb[0].mxu0
        %v616 = vadd.f32 0.0, %v615
        %v617 = vpop.f32.mrb[0].mxu0
        %v618 = vpop.f32.mrb[0].mxu0
        %v619 = vadd.f32 0.0, %v618
        %v620 = vpop.f32.mrb[0].mxu0
        %621 = vmatprep.mubr.bf16.mxu0 0
        %622 = vmatmul.mubr.bf16.gmra.mrb[0].mxu0 %v523
        %v623 = vpop.f32.mrb[0].mxu0
        %v624 = vadd.f32 0.0, %v623
        %v625 = vpop.f32.mrb[0].mxu0
        %v626 = vpop.f32.mrb[0].mxu0
        %v627 = vadd.f32 0.0, %v626
        %v628 = vpop.f32.mrb[0].mxu0
        %629 = vmatprep.mubr.bf16.mxu0 0
        %630 = vmatmul.mubr.bf16.gmra.mrb[0].mxu0 %v526
        %v631 = vpop.f32.mrb[0].mxu0
        %v632 = vadd.f32 0.0, %v631
        %v633 = vpop.f32.mrb[0].mxu0
        %v634 = vpop.f32.mrb[0].mxu0
        %v635 = vadd.f32 0.0, %v634
        %v636 = vpop.f32.mrb[0].mxu0
        %637 = vmatprep.mubr.bf16.mxu0 0
        %638 = vmatmul.mubr.bf16.gmra.mrb[0].mxu0 %v529
        %v639 = vpop.f32.mrb[0].mxu0
        %v640 = vadd.f32 0.0, %v639
        %v641 = vpop.f32.mrb[0].mxu0
        %v642 = vpop.f32.mrb[0].mxu0
        %v643 = vadd.f32 0.0, %v642
        %v644 = vpop.f32.mrb[0].mxu0
        %645 = vmatprep.mubr.bf16.mxu0 0
        %646 = vmatmul.mubr.bf16.gmra.mrb[0].mxu0 %v532
        %v647 = vpop.f32.mrb[0].mxu0
        %v648 = vadd.f32 0.0, %v647
        %v649 = vpop.f32.mrb[0].mxu0
        %v650 = vpop.f32.mrb[0].mxu0
        %v651 = vadd.f32 0.0, %v650
        %v652 = vpop.f32.mrb[0].mxu0
        %653 = vmatprep.mubr.bf16.mxu0 0
        %654 = vmatmul.mubr.bf16.gmra.mrb[0].mxu0 %v535
        %v655 = vpop.f32.mrb[0].mxu0
        %v656 = vadd.f32 0.0, %v655
        %v657 = vpop.f32.mrb[0].mxu0
        %v658 = vpop.f32.mrb[0].mxu0
        %v659 = vadd.f32 0.0, %v658
        %v660 = vpop.f32.mrb[0].mxu0
        %661 = vmatprep.mubr.bf16.mxu0 0
        %662 = vmatmul.mubr.bf16.gmra.mrb[0].mxu0 %v538
        %v663 = vpop.f32.mrb[0].mxu0
        %v664 = vadd.f32 0.0, %v663
        %v665 = vpop.f32.mrb[0].mxu0
        %v666 = vpop.f32.mrb[0].mxu0
        %v667 = vadd.f32 0.0, %v666
        %v668 = vpop.f32.mrb[0].mxu0
        %669 = vmatprep.mubr.bf16.mxu0 0
        %670 = vmatmul.mubr.bf16.gmra.mrb[0].mxu0 %v541
        %v671 = vpop.f32.mrb[0].mxu0
        %v672 = vadd.f32 0.0, %v671
        %v673 = vpop.f32.mrb[0].mxu0
        %v674 = vpop.f32.mrb[0].mxu0
        %v675 = vadd.f32 0.0, %v674
        %v676 = vpop.f32.mrb[0].mxu0
        %677 = vmatprep.mubr.bf16.mxu0 0
        %678 = vmatmul.mubr.bf16.gmra.mrb[0].mxu0 %v544
        %v679 = vpop.f32.mrb[0].mxu0
        %v680 = vadd.f32 0.0, %v679
        %v681 = vpop.f32.mrb[0].mxu0
        %v682 = vpop.f32.mrb[0].mxu0
        %v683 = vadd.f32 0.0, %v682
        %v684 = vpop.f32.mrb[0].mxu0
        %685 = vmatprep.mubr.bf16.mxu0 0
        %686 = vmatmul.mubr.bf16.gmra.mrb[0].mxu0 %v547
        %v687 = vpop.f32.mrb[0].mxu0
        %v688 = vadd.f32 0.0, %v687
        %v689 = vpop.f32.mrb[0].mxu0
        %v690 = vpop.f32.mrb[0].mxu0
        %v691 = vadd.f32 0.0, %v690
        %v692 = vpop.f32.mrb[0].mxu0
        %693 = vmatprep.mubr.bf16.mxu0 0
        %694 = vmatmul.mubr.bf16.gmra.mrb[0].mxu0 %v550
        %v695 = vpop.f32.mrb[0].mxu0
        %v696 = vadd.f32 0.0, %v695
        %v697 = vpop.f32.mrb[0].mxu0
        %v698 = vpop.f32.mrb[0].mxu0
        %v699 = vadd.f32 0.0, %v698
        %v700 = vpop.f32.mrb[0].mxu0
        %701 = vmatprep.mubr.bf16.mxu0 0
        %702 = vmatmul.mubr.bf16.gmra.mrb[0].mxu0 %v553
        %v703 = vpop.f32.mrb[0].mxu0
        %v704 = vadd.f32 0.0, %v703
        %v705 = vpop.f32.mrb[0].mxu0
        %v706 = vpop.f32.mrb[0].mxu0
        %v707 = vadd.f32 0.0, %v706
        %v708 = vpop.f32.mrb[0].mxu0
        %709 = vmatprep.mubr.bf16.mxu0 0
        %710 = vmatmul.mubr.bf16.gmra.mrb[0].mxu0 %v556
        %v711 = vpop.f32.mrb[0].mxu0
        %v712 = vadd.f32 0.0, %v711
        %v713 = vpop.f32.mrb[0].mxu0
        %v714 = vpop.f32.mrb[0].mxu0
        %v715 = vadd.f32 0.0, %v714
        %v716 = vpop.f32.mrb[0].mxu0
        %717 = vmatprep.mubr.bf16.mxu0 0
        %718 = vmatmul.mubr.bf16.gmra.mrb[0].mxu0 %v559
        %v719 = vpop.f32.mrb[0].mxu0
        %v720 = vadd.f32 0.0, %v719
        %v721 = vpop.f32.mrb[0].mxu0
        %v722 = vpop.f32.mrb[0].mxu0
        %v723 = vadd.f32 0.0, %v722
        %v724 = vpop.f32.mrb[0].mxu0
        %725 = vdwg.mxu0
        %p726 = scmp.eq.s32.totalorder %s22, 0
        %p727 = scmp.eq.s32.totalorder %s23, 0
        %p728 = pnand %p726, %p727
        %p729 = pneg %p728
        // Predicated region
        $region78: #{tpu_custom_call.1} parent=72 // pred_check
          _
        $region79: #{tpu_custom_call.1} parent=72 // pred_check_branch
          %731 = sbr.rel (%p728) target = $region81
        $region80: #{tpu_custom_call.1} parent=72 // pred_region
          %732 = vst [vmem:[#allocation2] sm:$0x1] 0.0
          %733 = vst [vmem:[#allocation3] sm:$0x1] 0.0
        $region81: #{tpu_custom_call.1} parent=72 // pred_fallthru
          _
        // Predicated region
        $region82: #{tpu_custom_call.1} parent=72 // pred_check
          %p734 = pneg %p726
        $region83: #{tpu_custom_call.1} parent=72 // pred_check_branch
          %736 = sbr.rel (%p734) target = $region85
        $region84: #{tpu_custom_call.1} parent=72 // pred_region
          %v737 = vld [vmem:[#allocation2] sm:$0x1]
          %v738 = vadd.f32 %v600, %v603
          %v739 = vadd.f32 %v738, %v608
          %v740 = vadd.f32 %v739, %v611
          %v741 = vadd.f32 %v740, %v616
          %v742 = vadd.f32 %v741, %v619
          %v743 = vadd.f32 %v742, %v624
          %v744 = vadd.f32 %v743, %v627
          %v745 = vadd.f32 %v744, %v632
          %v746 = vadd.f32 %v745, %v635
          %v747 = vadd.f32 %v746, %v640
          %v748 = vadd.f32 %v747, %v643
          %v749 = vadd.f32 %v748, %v648
          %v750 = vadd.f32 %v749, %v651
          %v751 = vadd.f32 %v750, %v656
          %v752 = vadd.f32 %v751, %v659
          %v753 = vadd.f32 %v752, %v664
          %v754 = vadd.f32 %v753, %v667
          %v755 = vadd.f32 %v754, %v672
          %v756 = vadd.f32 %v755, %v675
          %v757 = vadd.f32 %v756, %v680
          %v758 = vadd.f32 %v757, %v683
          %v759 = vadd.f32 %v758, %v688
          %v760 = vadd.f32 %v759, %v691
          %v761 = vadd.f32 %v760, %v696
          %v762 = vadd.f32 %v761, %v699
          %v763 = vadd.f32 %v762, %v704
          %v764 = vadd.f32 %v763, %v707
          %v765 = vadd.f32 %v764, %v712
          %v766 = vadd.f32 %v765, %v715
          %v767 = vadd.f32 %v766, %v720
          %v768 = vadd.f32 %v767, %v723
          %v769 = vrot.slane %v768, 4
          %v770 = vadd.f32 %v768, %v769
          %v771 = vrot.slane %v770, 2
          %v772 = vadd.f32 %v770, %v771
          %v773 = vrot.slane %v772, 1
          %v774 = vadd.f32 %v772, %v773
          %v775 = vadd.f32 %v737, %v774
          %776 = vst [vmem:[#allocation2] sm:$0x1] %v775
          %v777 = vld [vmem:[#allocation3] sm:$0x1]
          %v778 = vmul.f32 %v600, %v600
          %v779 = vmul.f32 %v603, %v603
          %v780 = vmul.f32 %v608, %v608
          %v781 = vmul.f32 %v611, %v611
          %v782 = vmul.f32 %v616, %v616
          %v783 = vmul.f32 %v619, %v619
          %v784 = vmul.f32 %v624, %v624
          %v785 = vmul.f32 %v627, %v627
          %v786 = vmul.f32 %v632, %v632
          %v787 = vmul.f32 %v635, %v635
          %v788 = vmul.f32 %v640, %v640
          %v789 = vmul.f32 %v643, %v643
          %v790 = vmul.f32 %v648, %v648
          %v791 = vmul.f32 %v651, %v651
          %v792 = vmul.f32 %v656, %v656
          %v793 = vmul.f32 %v659, %v659
          %v794 = vmul.f32 %v664, %v664
          %v795 = vmul.f32 %v667, %v667
          %v796 = vmul.f32 %v672, %v672
          %v797 = vmul.f32 %v675, %v675
          %v798 = vmul.f32 %v680, %v680
          %v799 = vmul.f32 %v683, %v683
          %v800 = vmul.f32 %v688, %v688
          %v801 = vmul.f32 %v691, %v691
          %v802 = vmul.f32 %v696, %v696
          %v803 = vmul.f32 %v699, %v699
          %v804 = vmul.f32 %v704, %v704
          %v805 = vmul.f32 %v707, %v707
          %v806 = vmul.f32 %v712, %v712
          %v807 = vmul.f32 %v715, %v715
          %v808 = vmul.f32 %v720, %v720
          %v809 = vmul.f32 %v723, %v723
          %v810 = vadd.f32 %v778, %v779
          %v811 = vadd.f32 %v810, %v780
          %v812 = vadd.f32 %v811, %v781
          %v813 = vadd.f32 %v812, %v782
          %v814 = vadd.f32 %v813, %v783
          %v815 = vadd.f32 %v814, %v784
          %v816 = vadd.f32 %v815, %v785
          %v817 = vadd.f32 %v816, %v786
          %v818 = vadd.f32 %v817, %v787
          %v819 = vadd.f32 %v818, %v788
          %v820 = vadd.f32 %v819, %v789
          %v821 = vadd.f32 %v820, %v790
          %v822 = vadd.f32 %v821, %v791
          %v823 = vadd.f32 %v822, %v792
          %v824 = vadd.f32 %v823, %v793
          %v825 = vadd.f32 %v824, %v794
          %v826 = vadd.f32 %v825, %v795
          %v827 = vadd.f32 %v826, %v796
          %v828 = vadd.f32 %v827, %v797
          %v829 = vadd.f32 %v828, %v798
          %v830 = vadd.f32 %v829, %v799
          %v831 = vadd.f32 %v830, %v800
          %v832 = vadd.f32 %v831, %v801
          %v833 = vadd.f32 %v832, %v802
          %v834 = vadd.f32 %v833, %v803
          %v835 = vadd.f32 %v834, %v804
          %v836 = vadd.f32 %v835, %v805
          %v837 = vadd.f32 %v836, %v806
          %v838 = vadd.f32 %v837, %v807
          %v839 = vadd.f32 %v838, %v808
          %v840 = vadd.f32 %v839, %v809
          %v841 = vrot.slane %v840, 4
          %v842 = vadd.f32 %v840, %v841
          %v843 = vrot.slane %v842, 2
          %v844 = vadd.f32 %v842, %v843
          %v845 = vrot.slane %v844, 1
          %v846 = vadd.f32 %v844, %v845
          %v847 = vadd.f32 %v777, %v846
          %848 = vst [vmem:[#allocation3] sm:$0x1] %v847
        $region85: #{tpu_custom_call.1} parent=72 // pred_fallthru
          _
        %p849 = scmp.eq.s32.totalorder %s22, 1
        %p850 = pnand %p849, %p727
        %p851 = pneg %p850
        // Predicated region
        $region86: #{tpu_custom_call.1} parent=72 // pred_check
          _
        $region87: #{tpu_custom_call.1} parent=72 // pred_check_branch
          %853 = sbr.rel (%p850) target = $region89
        $region88: #{tpu_custom_call.1} parent=72 // pred_region
          %v854 = vld [vmem:[#allocation2] sm:$0x1]
          %v855 = vrcp.pop 512.0
          %v856 = vmul.f32 %v854, %v855
          %v857 = vld [vmem:[#allocation3] sm:$0x1]
          %v858 = vmul.f32 %v857, %v855
          %v859 = vmul.f32 %v856, %v856
          %v860 = vsub.f32 %v858, %v859
          %v861 = vmax.f32 %v860, 0.0
          %v862 = vadd.f32 %v861, 1e-05
          %v863 = vrsqrt.pop %v862
          %v864 = vld [vmem:[%s2] sm:$0x1]
          %v865 = vmul.f32 %v864, %v863
          %v866 = vld [vmem:[%s3] sm:$0x1]
          %v867 = vmul.f32 %v856, %v865
          %v868 = vsub.f32 %v866, %v867
          %869 = vst [vmem:[#allocation2] sm:$0x1] %v865
          %870 = vst [vmem:[#allocation3] sm:$0x1] %v868
        $region89: #{tpu_custom_call.1} parent=72 // pred_fallthru
          _
        // Predicated region
        $region90: #{tpu_custom_call.1} parent=72 // pred_check
          %p871 = pneg %p849
        $region91: #{tpu_custom_call.1} parent=72 // pred_check_branch
          %873 = sbr.rel (%p871) target = $region93
        $region92: #{tpu_custom_call.1} parent=72 // pred_region
          %v874 = vld [vmem:[#allocation2] sm:$0x1]
          %v876 = vlaneseq
          %v877 = vshrl.u32 %v876, 7
          %v878 = vsub.s32 0, %v877
          %v879 = vrot.slane %v874, %v878
          %v881 = vmul.f32 %v600, %v879
          %v882 = vmul.f32 %v603, %v879
          %v883 = vmul.f32 %v608, %v879
          %v884 = vmul.f32 %v611, %v879
          %v885 = vmul.f32 %v616, %v879
          %v886 = vmul.f32 %v619, %v879
          %v887 = vmul.f32 %v624, %v879
          %v888 = vmul.f32 %v627, %v879
          %v889 = vmul.f32 %v632, %v879
          %v890 = vmul.f32 %v635, %v879
          %v891 = vmul.f32 %v640, %v879
          %v892 = vmul.f32 %v643, %v879
          %v893 = vmul.f32 %v648, %v879
          %v894 = vmul.f32 %v651, %v879
          %v895 = vmul.f32 %v656, %v879
          %v896 = vmul.f32 %v659, %v879
          %v897 = vmul.f32 %v664, %v879
          %v898 = vmul.f32 %v667, %v879
          %v899 = vmul.f32 %v672, %v879
          %v900 = vmul.f32 %v675, %v879
          %v901 = vmul.f32 %v680, %v879
          %v902 = vmul.f32 %v683, %v879
          %v903 = vmul.f32 %v688, %v879
          %v904 = vmul.f32 %v691, %v879
          %v905 = vmul.f32 %v696, %v879
          %v906 = vmul.f32 %v699, %v879
          %v907 = vmul.f32 %v704, %v879
          %v908 = vmul.f32 %v707, %v879
          %v909 = vmul.f32 %v712, %v879
          %v910 = vmul.f32 %v715, %v879
          %v911 = vmul.f32 %v720, %v879
          %v912 = vmul.f32 %v723, %v879
          %v913 = vld [vmem:[#allocation3] sm:$0x1]
          %v915 = vlaneseq
          %v916 = vshrl.u32 %v915, 7
          %v917 = vsub.s32 0, %v916
          %v918 = vrot.slane %v913, %v917
          %v920 = vadd.f32 %v881, %v918
          %v921 = vadd.f32 %v882, %v918
          %v922 = vadd.f32 %v883, %v918
          %v923 = vadd.f32 %v884, %v918
          %v924 = vadd.f32 %v885, %v918
          %v925 = vadd.f32 %v886, %v918
          %v926 = vadd.f32 %v887, %v918
          %v927 = vadd.f32 %v888, %v918
          %v928 = vadd.f32 %v889, %v918
          %v929 = vadd.f32 %v890, %v918
          %v930 = vadd.f32 %v891, %v918
          %v931 = vadd.f32 %v892, %v918
          %v932 = vadd.f32 %v893, %v918
          %v933 = vadd.f32 %v894, %v918
          %v934 = vadd.f32 %v895, %v918
          %v935 = vadd.f32 %v896, %v918
          %v936 = vadd.f32 %v897, %v918
          %v937 = vadd.f32 %v898, %v918
          %v938 = vadd.f32 %v899, %v918
          %v939 = vadd.f32 %v900, %v918
          %v940 = vadd.f32 %v901, %v918
          %v941 = vadd.f32 %v902, %v918
          %v942 = vadd.f32 %v903, %v918
          %v943 = vadd.f32 %v904, %v918
          %v944 = vadd.f32 %v905, %v918
          %v945 = vadd.f32 %v906, %v918
          %v946 = vadd.f32 %v907, %v918
          %v947 = vadd.f32 %v908, %v918
          %v948 = vadd.f32 %v909, %v918
          %v949 = vadd.f32 %v910, %v918
          %v950 = vadd.f32 %v911, %v918
          %v951 = vadd.f32 %v912, %v918
          %v952 = vmax.f32 %v920, %v928
          %v953 = vmax.f32 %v921, %v929
          %v954 = vmax.f32 %v922, %v930
          %v955 = vmax.f32 %v923, %v931
          %v956 = vmax.f32 %v924, %v932
          %v957 = vmax.f32 %v925, %v933
          %v958 = vmax.f32 %v926, %v934
          %v959 = vmax.f32 %v927, %v935
          %v960 = vmax.f32 %v936, %v944
          %v961 = vmax.f32 %v937, %v945
          %v962 = vmax.f32 %v938, %v946
          %v963 = vmax.f32 %v939, %v947
          %v964 = vmax.f32 %v940, %v948
          %v965 = vmax.f32 %v941, %v949
          %v966 = vmax.f32 %v942, %v950
          %v967 = vmax.f32 %v943, %v951
          %v968 = vmax.f32 %v952, %v960
          %v969 = vmax.f32 %v953, %v961
          %v970 = vmax.f32 %v954, %v962
          %v971 = vmax.f32 %v955, %v963
          %v972 = vmax.f32 %v956, %v964
          %v973 = vmax.f32 %v957, %v965
          %v974 = vmax.f32 %v958, %v966
          %v975 = vmax.f32 %v959, %v967
          %v976 = vmax.f32 %v968, 0.0
          %v977 = vmax.f32 %v969, 0.0
          %v978 = vmax.f32 %v970, 0.0
          %v979 = vmax.f32 %v971, 0.0
          %v980 = vmax.f32 %v972, 0.0
          %v981 = vmax.f32 %v973, 0.0
          %v982 = vmax.f32 %v974, 0.0
          %v983 = vmax.f32 %v975, 0.0
          %984 = vst [vmem:[%s375] sm:$0xff] %v976
          %985 = vst [vmem:[%s375 + $0x8] sm:$0xff] %v977
          %986 = vst [vmem:[%s375 + $0x10] sm:$0xff] %v978
          %987 = vst [vmem:[%s375 + $0x18] sm:$0xff] %v979
          %988 = vst [vmem:[%s375 + $0x20] sm:$0xff] %v980
          %989 = vst [vmem:[%s375 + $0x28] sm:$0xff] %v981
          %990 = vst [vmem:[%s375 + $0x30] sm:$0xff] %v982
          %991 = vst [vmem:[%s375 + $0x38] sm:$0xff] %v983
        $region93: #{tpu_custom_call.1} parent=72 // pred_fallthru
          _
        %s992 = sand.u32 %s129, 1
        %s993 = scalar_lea.sflag [#allocation6], %s992
        %s994 = sand.u32 %s129, 1
        %s995 = smul.addr %s994, 64
        %s996 = scalar_lea.vmem [#allocation5], %s995
        // Predicated region
        $region94: #{tpu_custom_call.1} parent=72 // pred_check
          %p997 = pneg %p139
        $region95: #{tpu_custom_call.1} parent=72 // pred_check_branch
          %999 = sbr.rel (%p997) target = $region97
        $region96: #{tpu_custom_call.1} parent=72 // pred_region
          %s1000 = smul.u32 %s22, %s23
          %s1001 = smul.u32 8, %s1000
          %s1003 = ssub.s32 1024, 1024
          %1004 = vsyncadd %s993, %s1003
          %s1005 = smul.addr %s1001, 128
          %s1006 = scalar_lea.hbm %s4, %s1005
          %s1007 = sshll.u32 %s996, 4
          %s1008 = int_to_ptr.vmem [resolvable:$true] %s1007
          %1013 = dma.vmem_to_hbm [thread:$0]  %s1008, 1024, %s1006, %s993, 128, 128, 8
        $region97: #{tpu_custom_call.1} parent=72 // pred_fallthru
          _
      $region73: #{tpu_custom_call.1} parent=5 // pred_fallthru
        _
      %p1014 = scmp.le.s32.totalorder 2, %s13
      // Predicated region
      $region98: #{tpu_custom_call.1} parent=5 // pred_check
        %p1015 = pneg %p1014
      $region99: #{tpu_custom_call.1} parent=5 // pred_check_branch
        %1017 = sbr.rel (%p1015) target = $region101
      $region100: #{tpu_custom_call.1} parent=5 // pred_region
        %s1018 = ssub.s32 %s13, 2
        // Predicated region
        $region102: #{tpu_custom_call.1} parent=100 // pred_check
          %p1019 = pneg %p145
        $region103: #{tpu_custom_call.1} parent=100 // pred_check_branch
          %1021 = sbr.rel (%p1019) target = $region105
        $region104: #{tpu_custom_call.1} parent=100 // pred_region
          %s1022 = sand.u32 %s130, 1
          %s1023 = scalar_lea.sflag [#allocation6], %s1022
          %s1024 = sand.u32 %s130, 1
          %s1025 = smul.addr %s1024, 64
          %s1026 = scalar_lea.vmem [#allocation5], %s1025
          %1027 = dma.done %s1023, 1024
        $region105: #{tpu_custom_call.1} parent=100 // pred_fallthru
          _
      $region101: #{tpu_custom_call.1} parent=5 // pred_fallthru
        _
    $region6: #{tpu_custom_call.1} parent=1 // loop_footer
      %s17 = sadd.s32 1, %s13
    $region7: #{tpu_custom_call.1} parent=1 // loop_footer_branch
      %12 = sbr.rel target = $region3
    $region8: #{tpu_custom_call.1} parent=1 // loop_exit
      _
    %1028 = vsyncpa [#allocation6], 1
    %s1029 = scalar_lea.sflag [#allocation6], 1
    %1030 = vsyncpa %s1029, 1

</llo_original>
